<compile_context>
chip_gen: v6e
topology: v6e:2x2x1
jax: 0.10.0
libtpu: 0.0.40
codegen_flags: <defaults>
</compile_context>

<pallas_src>
import jax
import jax.numpy as jnp
import numpy as np
from jax.experimental import pallas as pl
from jax.experimental.pallas import tpu as pltpu

S = 4            # number of separated sources (len(model.sources) == 4)
CIN = 2          # stereo channels after .expand(-1, 2, -1)
K = 7            # synthetic model conv taps ('same' padding, odd kernel)
P = K // 2
LANES = 128

SAMPLING_RATE = 44100
SEGMENT = 10.0
OVERLAP = 0.1
CHUNK_LEN = int(SAMPLING_RATE * SEGMENT * (1 + OVERLAP))   # 485100

DEFAULT_MAX_TILE_T = 65536   # samples per grid step = 512 rows x 128 lanes


def separator_kernel(lens_ref, xc_ref, xl_ref, xr_ref, par_ref, o_ref, win_ref):
    """One grid step = one (batch, time-tile) of R rows x 128 lanes.

    lens_ref : SMEM (B,)           int32  scalar-prefetched sequence lengths
    xc_ref   : VMEM (1, R, 128)    f32    current raw-audio tile (dense rows)
    xl_ref   : VMEM (1, 8, 128)    f32    8-row block ending at row t*R-1
    xr_ref   : VMEM (1, 8, 128)    f32    8-row block starting at row (t+1)*R
    par_ref  : VMEM (1, 8, 128)    f32    row 0: [mean, std, 1/std];
                                          rows 1..4: [w_eff(7 taps) | bias]
    o_ref    : VMEM (1, S, R, 128) f32    separated-sources tile
    win_ref  : VMEM (R+16, 128)    f32    scratch: normalized haloed window,
                                          centre rows [8, 8+R), halo rows 7 / 8+R
    """
    b = pl.program_id(0)
    t = pl.program_id(1)
    R = xc_ref.shape[1]

    length = lens_ref[b]                      # int32 scalar
    mean = par_ref[0, 0:1, 0:1]               # (1, 1)
    std = par_ref[0, 0:1, 1:2]                # (1, 1)
    inv_std = par_ref[0, 0:1, 2:3]            # (1, 1)

    # Global sample index of every element of the tile (g = base + r*128 + c).
    base = t * (R * LANES)
    row_ids = jax.lax.broadcasted_iota(jnp.int32, (R, LANES), 0)
    lane_ids = jax.lax.broadcasted_iota(jnp.int32, (R, LANES), 1)
    g = base + row_ids * LANES + lane_ids
    valid = g < length                        # (R, 128) bool

    # Normalize + zero beyond-length samples once (x[~mask] = 0 in forward()).
    x_n = jnp.where(valid, (xc_ref[0] - mean) * inv_std, 0.0)     # (R, 128)

    # Single-row halos.  The clamped index maps load in-bounds-but-wrong rows
    # at sequence edges; the global-index masks below zero them, which also
    # reproduces the conv 'same' zero padding at the sequence boundaries.
    lane1 = jax.lax.broadcasted_iota(jnp.int32, (1, LANES), 1)
    g_prev = (base - LANES) + lane1
    prev_n = jnp.where((g_prev >= 0) & (g_prev < length),
                       (xl_ref[0, 7:8, :] - mean) * inv_std, 0.0)  # (1, 128)
    g_next = (base + R * LANES) + lane1
    next_n = jnp.where(g_next < length,
                       (xr_ref[0, 0:1, :] - mean) * inv_std, 0.0)  # (1, 128)

    # Haloed window (normalized in place, centre 8-row aligned at row 8).
    win_ref[8:8 + R, :] = x_n
    win_ref[7:8, :] = prev_n
    win_ref[8 + R:9 + R, :] = next_n

    x_dn = win_ref[7:7 + R, :]      # value at row r-1 for every row r
    x_up = win_ref[9:9 + R, :]      # value at row r+1 for every row r

    # The 7 tap-shifted views of the flattened time axis: lane rolls (XLU)
    # plus a row-boundary select using the neighbouring-row views.
    shifted = [None] * K
    shifted[P] = x_n
    for d in range(1, P + 1):
        same = pltpu.roll(x_n, shift=LANES - d, axis=1)    # x_n[r, (c+d)%128]
        nxt = pltpu.roll(x_up, shift=LANES - d, axis=1)    # x_n[r+1, (c+d)%128]
        shifted[P + d] = jnp.where(lane_ids < LANES - d, same, nxt)
        same2 = pltpu.roll(x_n, shift=d, axis=1)           # x_n[r, (c-d)%128]
        prv = pltpu.roll(x_dn, shift=d, axis=1)            # x_n[r-1, (c-d)%128]
        shifted[P - d] = jnp.where(lane_ids >= d, same2, prv)

    # Per-source VPU accumulation (bias folded in), de-normalize, re-mask.
    for s in range(S):
        acc = shifted[0] * par_ref[0, 1 + s:2 + s, 0:1]
        for k in range(1, K):
            acc = acc + shifted[k] * par_ref[0, 1 + s:2 + s, k:k + 1]
        acc = acc + par_ref[0, 1 + s:2 + s, K:K + 1]       # bias
        y = acc * std + mean
        o_ref[0, s] = jnp.where(valid, y, 0.0)


def _round_up(v, m):
    return ((v + m - 1) // m) * m


def source_separator_forward(x, x_lens, conv_w, conv_b,
                             max_tile_t=DEFAULT_MAX_TILE_T):
    """x: (B, T) f32, x_lens: (B,) int,
    conv_w: (S*CIN, CIN, K) f32 (torch Conv1d layout, out index o = s*CIN + c),
    conv_b: (S*CIN,) f32.  Returns (B, S, T) f32."""
    B, T = x.shape
    assert T <= CHUNK_LEN, "only the short (un-chunked) get_sources path is implemented"
    assert max_tile_t % 1024 == 0

    # ---- fold the synthetic stereo model into a mono->source conv + bias ----
    # Both stereo inputs carry the same signal (expand) -> sum over c_in;
    # model(...).mean(dim=-2) averages the two stereo outputs per source.
    w_sum = conv_w.sum(axis=1).reshape(S, CIN, K)          # rows o = s*CIN + c
    w_eff = 0.5 * (w_sum[:, 0] + w_sum[:, 1])              # (S, K)
    b_eff = 0.5 * (conv_b.reshape(S, CIN)[:, 0] + conv_b.reshape(S, CIN)[:, 1])

    # ---- single-pass masked mean / std (one read of x) ----------------------
    lens = x_lens.astype(jnp.int32)
    t_idx = jnp.arange(T, dtype=jnp.int32)[None, :]
    maskf = (t_idx < lens[:, None]).astype(jnp.float32)
    cnt = jnp.maximum(lens.astype(jnp.float32), 1.0)
    xm = x.astype(jnp.float32) * maskf
    s1 = jnp.sum(xm, axis=-1)
    s2 = jnp.sum(xm * x, axis=-1)
    mean = s1 / cnt
    var = jnp.maximum(s2 / cnt - mean * mean, 0.0)
    std = jnp.sqrt(var)
    std = jnp.where(std > 0.0, std, 1.0)                   # guard silent segments

    # One tiny per-batch parameter block: stats + folded weights/bias.
    params = jnp.zeros((B, 8, LANES), jnp.float32)
    params = params.at[:, 0, 0].set(mean)
    params = params.at[:, 0, 1].set(std)
    params = params.at[:, 0, 2].set(1.0 / std)
    params = params.at[:, 1:1 + S, :K].set(
        jnp.broadcast_to(w_eff.astype(jnp.float32), (B, S, K)))
    params = params.at[:, 1:1 + S, K].set(
        jnp.broadcast_to(b_eff.astype(jnp.float32), (B, S)))

    # ---- tiling: dense (rows, 128) layout, big adaptive time tiles ----------
    tile_t = min(max_tile_t, _round_up(T, 1024))   # multiple of 1024 => R % 8 == 0
    R = tile_t // LANES
    RB = R // 8
    T_pad = _round_up(T, tile_t)
    n_t = T_pad // tile_t
    n_rows = T_pad // LANES
    nb8 = n_rows // 8

    xp = jnp.pad(x.astype(jnp.float32), ((0, 0), (0, T_pad - T)))
    xp = xp.reshape(B, n_rows, LANES)

    grid_spec = pltpu.PrefetchScalarGridSpec(
        num_scalar_prefetch=1,
        grid=(B, n_t),
        in_specs=[
            # current tile: R dense rows
            pl.BlockSpec((1, R, LANES), lambda b, t, L: (b, t, 0)),
            # 8-row block whose last row is the sample right before the tile
            pl.BlockSpec((1, 8, LANES),
                         lambda b, t, L: (b, jnp.maximum(t * RB - 1, 0), 0)),
            # 8-row block whose first row is the sample right after the tile
            pl.BlockSpec((1, 8, LANES),
                         lambda b, t, L: (b, jnp.minimum((t + 1) * RB, nb8 - 1), 0)),
            # per-batch params (constant across time tiles)
            pl.BlockSpec((1, 8, LANES), lambda b, t, L: (b, 0, 0)),
        ],
        out_specs=pl.BlockSpec((1, S, R, LANES), lambda b, t, L: (b, 0, t, 0)),
        scratch_shapes=[pltpu.VMEM((R + 16, LANES), jnp.float32)],
    )

    # Explicit VMEM budget: in/out double buffers + window scratch + temp headroom,
    # floored at 32 MiB and capped at 64 MiB (safe on v5e/v6e/v7x).
    est_bytes = 4 * LANES * (2 * R + 32 + 2 * S * R + (R + 16) + 20 * R + 16)
    vmem_limit = int(min(64 * 1024 * 1024, max(32 * 1024 * 1024, 2 * est_bytes)))

    out = pl.pallas_call(
        separator_kernel,
        out_shape=jax.ShapeDtypeStruct((B, S, n_rows, LANES), jnp.float32),
        grid_spec=grid_spec,
        compiler_params=pltpu.CompilerParams(
            dimension_semantics=("parallel", "parallel"),
            vmem_limit_bytes=vmem_limit),
    )(lens, xp, xp, xp, params)

    return out.reshape(B, S, T_pad)[:, :, :T]


def reference_forward(x, x_lens, conv_w, conv_b):
    """Pure-JAX reference mirroring the PyTorch forward (short path)."""
    B, T = x.shape
    t = jnp.arange(T)[None, :]
    mask = t < x_lens[:, None]
    mf = mask.astype(jnp.float32)
    cnt = x_lens.astype(jnp.float32)[:, None]
    mean = (x * mf).sum(-1, keepdims=True) / cnt
    var = (((x - mean) * mf) ** 2).sum(-1, keepdims=True) / cnt
    std = jnp.sqrt(var)
    xn = jnp.where(mask, (x - mean) / std, 0.0)
    audio = jnp.broadcast_to(xn[:, None, :], (B, CIN, T))           # expand to stereo
    pad = jnp.pad(audio, ((0, 0), (0, 0), (P, P)))
    out = jnp.zeros((B, S * CIN, T), jnp.float32)
    for o in range(S * CIN):
        acc = jnp.full((B, T), conv_b[o])
        for c in range(CIN):
            for k in range(K):
                acc = acc + conv_w[o, c, k] * pad[:, c, k:k + T]
        out = out.at[:, o].set(acc)
    y = out.reshape(B, S, CIN, T).mean(axis=2)                      # .mean(dim=-2)
    y = y * std[:, None, :] + mean[:, None, :]
    y = jnp.where(mask[:, None, :], y, 0.0)
    return y


if __name__ == "__main__":
    key = jax.random.PRNGKey(0)
    k_w, k_b, k_x1, k_x2, k_x3 = jax.random.split(key, 5)

    conv_w = (jax.random.normal(k_w, (S * CIN, CIN, K), jnp.float32)
              * (1.0 / (CIN * K)) ** 0.5)
    conv_b = jax.random.normal(k_b, (S * CIN,), jnp.float32) * 0.01

    # Test 1: small input, single tile, T not a multiple of 128.
    B, T = 2, 1000
    x = jax.random.normal(k_x1, (B, T), jnp.float32)
    x_lens = jnp.array([T, 700], dtype=jnp.int32)
    y = jax.block_until_ready(source_separator_forward(x, x_lens, conv_w, conv_b))
    y_ref = reference_forward(x, x_lens, conv_w, conv_b)
    np.testing.assert_allclose(np.asarray(y), np.asarray(y_ref), rtol=1e-3, atol=1e-3)

    # Test 2: several time tiles (exercises cross-tile halos + 2-D parallel grid).
    B, T = 2, 5000
    x = jax.random.normal(k_x2, (B, T), jnp.float32)
    x_lens = jnp.array([5000, 3300], dtype=jnp.int32)
    y = jax.block_until_ready(
        source_separator_forward(x, x_lens, conv_w, conv_b, max_tile_t=2048))
    y_ref = reference_forward(x, x_lens, conv_w, conv_b)
    np.testing.assert_allclose(np.asarray(y), np.asarray(y_ref), rtol=1e-3, atol=1e-3)

    # Test 3: production-size tile (R = 512 rows) on a medium-length signal.
    B, T = 2, 70000
    x = jax.random.normal(k_x3, (B, T), jnp.float32)
    x_lens = jnp.array([70000, 44100], dtype=jnp.int32)
    y = jax.block_until_ready(source_separator_forward(x, x_lens, conv_w, conv_b))
    y_ref = reference_forward(x, x_lens, conv_w, conv_b)
    np.testing.assert_allclose(np.asarray(y), np.asarray(y_ref), rtol=1e-3, atol=1e-3)

    print("KERNEL_OK")
</pallas_src>

<mosaic_0001>
module attributes {stable_mosaic.version = 11 : i64} {
  func.func @separator_kernel(%arg0: i32, %arg1: i32, %arg2: memref<2xi32, #tpu.memory_space<smem>>, %arg3: memref<1x8x128xf32, #tpu.memory_space<vmem>>, %arg4: memref<1x8x128xf32, #tpu.memory_space<vmem>>, %arg5: memref<1x8x128xf32, #tpu.memory_space<vmem>>, %arg6: memref<1x8x128xf32, #tpu.memory_space<vmem>>, %arg7: memref<1x4x8x128xf32, #tpu.memory_space<vmem>>, %arg8: memref<24x128xf32, #tpu.memory_space<vmem>>) attributes {dimension_semantics = [#tpu.dimension_semantics<parallel>, #tpu.dimension_semantics<parallel>], iteration_bounds = array<i64: 2, 1>, scalar_prefetch = 1 : i64, scratch_operands = 1 : i64, tpu.core_type = #tpu.core_type<tc>, window_params = [{transform_indices = @transform_0, window_bounds = array<i64: 1, 8, 128>}, {transform_indices = @transform_1, window_bounds = array<i64: 1, 8, 128>}, {transform_indices = @transform_2, window_bounds = array<i64: 1, 8, 128>}, {transform_indices = @transform_3, window_bounds = array<i64: 1, 8, 128>}, {transform_indices = @transform_4, window_bounds = array<i64: 1, 4, 8, 128>}]} {
    %0 = arith.index_cast %arg0 : i32 to index
    %1 = memref.load %arg2[%0] : memref<2xi32, #tpu.memory_space<smem>>
    %c0 = arith.constant 0 : index
    %c0_0 = arith.constant 0 : index
    %c0_1 = arith.constant 0 : index
    %2 = vector.load %arg6[%c0, %c0_0, %c0_1] : memref<1x8x128xf32, #tpu.memory_space<vmem>>, vector<1x1x1xf32>
    %3 = vector.shape_cast %2 : vector<1x1x1xf32> to vector<1x1xf32>
    %c0_2 = arith.constant 0 : index
    %c0_3 = arith.constant 0 : index
    %c1 = arith.constant 1 : index
    %4 = vector.load %arg6[%c0_2, %c0_3, %c1] : memref<1x8x128xf32, #tpu.memory_space<vmem>>, vector<1x1x1xf32>
    %5 = vector.shape_cast %4 : vector<1x1x1xf32> to vector<1x1xf32>
    %c0_4 = arith.constant 0 : index
    %c0_5 = arith.constant 0 : index
    %c2 = arith.constant 2 : index
    %6 = vector.load %arg6[%c0_4, %c0_5, %c2] : memref<1x8x128xf32, #tpu.memory_space<vmem>>, vector<1x1x1xf32>
    %7 = vector.shape_cast %6 : vector<1x1x1xf32> to vector<1x1xf32>
    %c1024_i32 = arith.constant 1024 : i32
    %8 = arith.muli %arg1, %c1024_i32 : i32
    %9 = tpu.iota {dimensions = array<i32: 0>} : vector<8x128xi32>
    %10 = tpu.iota {dimensions = array<i32: 1>} : vector<8x128xi32>
    %c128_i32 = arith.constant 128 : i32
    %11 = vector.broadcast %c128_i32 : i32 to vector<8x128xi32>
    %12 = arith.muli %9, %11 : vector<8x128xi32>
    %13 = vector.broadcast %8 : i32 to vector<8x128xi32>
    %14 = arith.addi %13, %12 : vector<8x128xi32>
    %15 = arith.addi %14, %10 : vector<8x128xi32>
    %16 = vector.broadcast %1 : i32 to vector<8x128xi32>
    %17 = arith.cmpi slt, %15, %16 : vector<8x128xi32>
    %c0_6 = arith.constant 0 : index
    %c0_7 = arith.constant 0 : index
    %c0_8 = arith.constant 0 : index
    %18 = vector.load %arg3[%c0_6, %c0_7, %c0_8] : memref<1x8x128xf32, #tpu.memory_space<vmem>>, vector<1x8x128xf32>
    %19 = vector.shape_cast %18 : vector<1x8x128xf32> to vector<8x128xf32>
    %20 = vector.broadcast %3 : vector<1x1xf32> to vector<8x128xf32>
    %21 = arith.subf %19, %20 : vector<8x128xf32>
    %22 = vector.broadcast %7 : vector<1x1xf32> to vector<8x128xf32>
    %23 = arith.mulf %21, %22 : vector<8x128xf32>
    %cst = arith.constant 0.000000e+00 : f32
    %24 = vector.broadcast %cst : f32 to vector<8x128xf32>
    %25 = arith.select %17, %23, %24 : vector<8x128xi1>, vector<8x128xf32>
    %26 = tpu.iota {dimensions = array<i32: 1>} : vector<1x128xi32>
    %c128_i32_9 = arith.constant 128 : i32
    %27 = arith.subi %8, %c128_i32_9 : i32
    %28 = vector.broadcast %27 : i32 to vector<1x128xi32>
    %29 = arith.addi %28, %26 : vector<1x128xi32>
    %c0_i32 = arith.constant 0 : i32
    %30 = vector.broadcast %c0_i32 : i32 to vector<1x128xi32>
    %31 = arith.cmpi sge, %29, %30 : vector<1x128xi32>
    %32 = vector.broadcast %1 : i32 to vector<1x128xi32>
    %33 = arith.cmpi slt, %29, %32 : vector<1x128xi32>
    %34 = arith.andi %31, %33 : vector<1x128xi1>
    %c0_10 = arith.constant 0 : index
    %c7 = arith.constant 7 : index
    %c0_11 = arith.constant 0 : index
    %35 = vector.load %arg4[%c0_10, %c7, %c0_11] : memref<1x8x128xf32, #tpu.memory_space<vmem>>, vector<1x1x128xf32>
    %36 = vector.shape_cast %35 : vector<1x1x128xf32> to vector<1x128xf32>
    %37 = vector.broadcast %3 : vector<1x1xf32> to vector<1x128xf32>
    %38 = arith.subf %36, %37 : vector<1x128xf32>
    %39 = vector.broadcast %7 : vector<1x1xf32> to vector<1x128xf32>
    %40 = arith.mulf %38, %39 : vector<1x128xf32>
    %cst_12 = arith.constant 0.000000e+00 : f32
    %41 = vector.broadcast %cst_12 : f32 to vector<1x128xf32>
    %42 = arith.select %34, %40, %41 : vector<1x128xi1>, vector<1x128xf32>
    %c1024_i32_13 = arith.constant 1024 : i32
    %43 = arith.addi %8, %c1024_i32_13 : i32
    %44 = vector.broadcast %43 : i32 to vector<1x128xi32>
    %45 = arith.addi %44, %26 : vector<1x128xi32>
    %46 = vector.broadcast %1 : i32 to vector<1x128xi32>
    %47 = arith.cmpi slt, %45, %46 : vector<1x128xi32>
    %c0_14 = arith.constant 0 : index
    %c0_15 = arith.constant 0 : index
    %c0_16 = arith.constant 0 : index
    %48 = vector.load %arg5[%c0_14, %c0_15, %c0_16] : memref<1x8x128xf32, #tpu.memory_space<vmem>>, vector<1x1x128xf32>
    %49 = vector.shape_cast %48 : vector<1x1x128xf32> to vector<1x128xf32>
    %50 = vector.broadcast %3 : vector<1x1xf32> to vector<1x128xf32>
    %51 = arith.subf %49, %50 : vector<1x128xf32>
    %52 = vector.broadcast %7 : vector<1x1xf32> to vector<1x128xf32>
    %53 = arith.mulf %51, %52 : vector<1x128xf32>
    %cst_17 = arith.constant 0.000000e+00 : f32
    %54 = vector.broadcast %cst_17 : f32 to vector<1x128xf32>
    %55 = arith.select %47, %53, %54 : vector<1x128xi1>, vector<1x128xf32>
    %c8 = arith.constant 8 : index
    %c0_18 = arith.constant 0 : index
    %56 = vector.load %arg8[%c8, %c0_18] : memref<24x128xf32, #tpu.memory_space<vmem>>, vector<8x128xf32>
    tpu.vector_store %arg8[%c8, %c0_18], %25 {strides = array<i32>} : memref<24x128xf32, #tpu.memory_space<vmem>>, vector<8x128xf32>,
    %c7_19 = arith.constant 7 : index
    %c0_20 = arith.constant 0 : index
    %57 = vector.load %arg8[%c7_19, %c0_20] : memref<24x128xf32, #tpu.memory_space<vmem>>, vector<1x128xf32>
    tpu.vector_store %arg8[%c7_19, %c0_20], %42 {strides = array<i32>} : memref<24x128xf32, #tpu.memory_space<vmem>>, vector<1x128xf32>,
    %c16 = arith.constant 16 : index
    %c0_21 = arith.constant 0 : index
    %58 = vector.load %arg8[%c16, %c0_21] : memref<24x128xf32, #tpu.memory_space<vmem>>, vector<1x128xf32>
    tpu.vector_store %arg8[%c16, %c0_21], %55 {strides = array<i32>} : memref<24x128xf32, #tpu.memory_space<vmem>>, vector<1x128xf32>,
    %c7_22 = arith.constant 7 : index
    %c0_23 = arith.constant 0 : index
    %59 = vector.load %arg8[%c7_22, %c0_23] : memref<24x128xf32, #tpu.memory_space<vmem>>, vector<8x128xf32>
    %c9 = arith.constant 9 : index
    %c0_24 = arith.constant 0 : index
    %60 = vector.load %arg8[%c9, %c0_24] : memref<24x128xf32, #tpu.memory_space<vmem>>, vector<8x128xf32>
    %c127_i32 = arith.constant 127 : i32
    %61 = tpu.dynamic_rotate %25 by %c127_i32 dim 1 : vector<8x128xf32>, i32 -> vector<8x128xf32>
    %c127_i32_25 = arith.constant 127 : i32
    %62 = tpu.dynamic_rotate %60 by %c127_i32_25 dim 1 : vector<8x128xf32>, i32 -> vector<8x128xf32>
    %c127_i32_26 = arith.constant 127 : i32
    %63 = vector.broadcast %c127_i32_26 : i32 to vector<8x128xi32>
    %64 = arith.cmpi slt, %10, %63 : vector<8x128xi32>
    %65 = arith.select %64, %61, %62 : vector<8x128xi1>, vector<8x128xf32>
    %c1_i32 = arith.constant 1 : i32
    %66 = tpu.dynamic_rotate %25 by %c1_i32 dim 1 : vector<8x128xf32>, i32 -> vector<8x128xf32>
    %c1_i32_27 = arith.constant 1 : i32
    %67 = tpu.dynamic_rotate %59 by %c1_i32_27 dim 1 : vector<8x128xf32>, i32 -> vector<8x128xf32>
    %c1_i32_28 = arith.constant 1 : i32
    %68 = vector.broadcast %c1_i32_28 : i32 to vector<8x128xi32>
    %69 = arith.cmpi sge, %10, %68 : vector<8x128xi32>
    %70 = arith.select %69, %66, %67 : vector<8x128xi1>, vector<8x128xf32>
    %c126_i32 = arith.constant 126 : i32
    %71 = tpu.dynamic_rotate %25 by %c126_i32 dim 1 : vector<8x128xf32>, i32 -> vector<8x128xf32>
    %c126_i32_29 = arith.constant 126 : i32
    %72 = tpu.dynamic_rotate %60 by %c126_i32_29 dim 1 : vector<8x128xf32>, i32 -> vector<8x128xf32>
    %c126_i32_30 = arith.constant 126 : i32
    %73 = vector.broadcast %c126_i32_30 : i32 to vector<8x128xi32>
    %74 = arith.cmpi slt, %10, %73 : vector<8x128xi32>
    %75 = arith.select %74, %71, %72 : vector<8x128xi1>, vector<8x128xf32>
    %c2_i32 = arith.constant 2 : i32
    %76 = tpu.dynamic_rotate %25 by %c2_i32 dim 1 : vector<8x128xf32>, i32 -> vector<8x128xf32>
    %c2_i32_31 = arith.constant 2 : i32
    %77 = tpu.dynamic_rotate %59 by %c2_i32_31 dim 1 : vector<8x128xf32>, i32 -> vector<8x128xf32>
    %c2_i32_32 = arith.constant 2 : i32
    %78 = vector.broadcast %c2_i32_32 : i32 to vector<8x128xi32>
    %79 = arith.cmpi sge, %10, %78 : vector<8x128xi32>
    %80 = arith.select %79, %76, %77 : vector<8x128xi1>, vector<8x128xf32>
    %c125_i32 = arith.constant 125 : i32
    %81 = tpu.dynamic_rotate %25 by %c125_i32 dim 1 : vector<8x128xf32>, i32 -> vector<8x128xf32>
    %c125_i32_33 = arith.constant 125 : i32
    %82 = tpu.dynamic_rotate %60 by %c125_i32_33 dim 1 : vector<8x128xf32>, i32 -> vector<8x128xf32>
    %c125_i32_34 = arith.constant 125 : i32
    %83 = vector.broadcast %c125_i32_34 : i32 to vector<8x128xi32>
    %84 = arith.cmpi slt, %10, %83 : vector<8x128xi32>
    %85 = arith.select %84, %81, %82 : vector<8x128xi1>, vector<8x128xf32>
    %c3_i32 = arith.constant 3 : i32
    %86 = tpu.dynamic_rotate %25 by %c3_i32 dim 1 : vector<8x128xf32>, i32 -> vector<8x128xf32>
    %c3_i32_35 = arith.constant 3 : i32
    %87 = tpu.dynamic_rotate %59 by %c3_i32_35 dim 1 : vector<8x128xf32>, i32 -> vector<8x128xf32>
    %c3_i32_36 = arith.constant 3 : i32
    %88 = vector.broadcast %c3_i32_36 : i32 to vector<8x128xi32>
    %89 = arith.cmpi sge, %10, %88 : vector<8x128xi32>
    %90 = arith.select %89, %86, %87 : vector<8x128xi1>, vector<8x128xf32>
    %c0_37 = arith.constant 0 : index
    %c1_38 = arith.constant 1 : index
    %c0_39 = arith.constant 0 : index
    %91 = vector.load %arg6[%c0_37, %c1_38, %c0_39] : memref<1x8x128xf32, #tpu.memory_space<vmem>>, vector<1x1x1xf32>
    %92 = vector.shape_cast %91 : vector<1x1x1xf32> to vector<1x1xf32>
    %93 = vector.broadcast %92 : vector<1x1xf32> to vector<8x128xf32>
    %94 = arith.mulf %90, %93 : vector<8x128xf32>
    %c0_40 = arith.constant 0 : index
    %c1_41 = arith.constant 1 : index
    %c1_42 = arith.constant 1 : index
    %95 = vector.load %arg6[%c0_40, %c1_41, %c1_42] : memref<1x8x128xf32, #tpu.memory_space<vmem>>, vector<1x1x1xf32>
    %96 = vector.shape_cast %95 : vector<1x1x1xf32> to vector<1x1xf32>
    %97 = vector.broadcast %96 : vector<1x1xf32> to vector<8x128xf32>
    %98 = arith.mulf %80, %97 : vector<8x128xf32>
    %99 = arith.addf %94, %98 : vector<8x128xf32>
    %c0_43 = arith.constant 0 : index
    %c1_44 = arith.constant 1 : index
    %c2_45 = arith.constant 2 : index
    %100 = vector.load %arg6[%c0_43, %c1_44, %c2_45] : memref<1x8x128xf32, #tpu.memory_space<vmem>>, vector<1x1x1xf32>
    %101 = vector.shape_cast %100 : vector<1x1x1xf32> to vector<1x1xf32>
    %102 = vector.broadcast %101 : vector<1x1xf32> to vector<8x128xf32>
    %103 = arith.mulf %70, %102 : vector<8x128xf32>
    %104 = arith.addf %99, %103 : vector<8x128xf32>
    %c0_46 = arith.constant 0 : index
    %c1_47 = arith.constant 1 : index
    %c3 = arith.constant 3 : index
    %105 = vector.load %arg6[%c0_46, %c1_47, %c3] : memref<1x8x128xf32, #tpu.memory_space<vmem>>, vector<1x1x1xf32>
    %106 = vector.shape_cast %105 : vector<1x1x1xf32> to vector<1x1xf32>
    %107 = vector.broadcast %106 : vector<1x1xf32> to vector<8x128xf32>
    %108 = arith.mulf %25, %107 : vector<8x128xf32>
    %109 = arith.addf %104, %108 : vector<8x128xf32>
    %c0_48 = arith.constant 0 : index
    %c1_49 = arith.constant 1 : index
    %c4 = arith.constant 4 : index
    %110 = vector.load %arg6[%c0_48, %c1_49, %c4] : memref<1x8x128xf32, #tpu.memory_space<vmem>>, vector<1x1x1xf32>
    %111 = vector.shape_cast %110 : vector<1x1x1xf32> to vector<1x1xf32>
    %112 = vector.broadcast %111 : vector<1x1xf32> to vector<8x128xf32>
    %113 = arith.mulf %65, %112 : vector<8x128xf32>
    %114 = arith.addf %109, %113 : vector<8x128xf32>
    %c0_50 = arith.constant 0 : index
    %c1_51 = arith.constant 1 : index
    %c5 = arith.constant 5 : index
    %115 = vector.load %arg6[%c0_50, %c1_51, %c5] : memref<1x8x128xf32, #tpu.memory_space<vmem>>, vector<1x1x1xf32>
    %116 = vector.shape_cast %115 : vector<1x1x1xf32> to vector<1x1xf32>
    %117 = vector.broadcast %116 : vector<1x1xf32> to vector<8x128xf32>
    %118 = arith.mulf %75, %117 : vector<8x128xf32>
    %119 = arith.addf %114, %118 : vector<8x128xf32>
    %c0_52 = arith.constant 0 : index
    %c1_53 = arith.constant 1 : index
    %c6 = arith.constant 6 : index
    %120 = vector.load %arg6[%c0_52, %c1_53, %c6] : memref<1x8x128xf32, #tpu.memory_space<vmem>>, vector<1x1x1xf32>
    %121 = vector.shape_cast %120 : vector<1x1x1xf32> to vector<1x1xf32>
    %122 = vector.broadcast %121 : vector<1x1xf32> to vector<8x128xf32>
    %123 = arith.mulf %85, %122 : vector<8x128xf32>
    %124 = arith.addf %119, %123 : vector<8x128xf32>
    %c0_54 = arith.constant 0 : index
    %c1_55 = arith.constant 1 : index
    %c7_56 = arith.constant 7 : index
    %125 = vector.load %arg6[%c0_54, %c1_55, %c7_56] : memref<1x8x128xf32, #tpu.memory_space<vmem>>, vector<1x1x1xf32>
    %126 = vector.shape_cast %125 : vector<1x1x1xf32> to vector<1x1xf32>
    %127 = vector.broadcast %126 : vector<1x1xf32> to vector<8x128xf32>
    %128 = arith.addf %124, %127 : vector<8x128xf32>
    %129 = vector.broadcast %5 : vector<1x1xf32> to vector<8x128xf32>
    %130 = arith.mulf %128, %129 : vector<8x128xf32>
    %131 = vector.broadcast %3 : vector<1x1xf32> to vector<8x128xf32>
    %132 = arith.addf %130, %131 : vector<8x128xf32>
    %cst_57 = arith.constant 0.000000e+00 : f32
    %133 = vector.broadcast %cst_57 : f32 to vector<8x128xf32>
    %134 = arith.select %17, %132, %133 : vector<8x128xi1>, vector<8x128xf32>
    %c0_58 = arith.constant 0 : index
    %c0_59 = arith.constant 0 : index
    %c0_60 = arith.constant 0 : index
    %c0_61 = arith.constant 0 : index
    %135 = vector.load %arg7[%c0_58, %c0_59, %c0_60, %c0_61] : memref<1x4x8x128xf32, #tpu.memory_space<vmem>>, vector<1x1x8x128xf32>
    %136 = vector.shape_cast %135 : vector<1x1x8x128xf32> to vector<8x128xf32>
    %137 = vector.shape_cast %134 : vector<8x128xf32> to vector<1x1x8x128xf32>
    tpu.vector_store %arg7[%c0_58, %c0_59, %c0_60, %c0_61], %137 {strides = array<i32>} : memref<1x4x8x128xf32, #tpu.memory_space<vmem>>, vector<1x1x8x128xf32>,
    %c0_62 = arith.constant 0 : index
    %c2_63 = arith.constant 2 : index
    %c0_64 = arith.constant 0 : index
    %138 = vector.load %arg6[%c0_62, %c2_63, %c0_64] : memref<1x8x128xf32, #tpu.memory_space<vmem>>, vector<1x1x1xf32>
    %139 = vector.shape_cast %138 : vector<1x1x1xf32> to vector<1x1xf32>
    %140 = vector.broadcast %139 : vector<1x1xf32> to vector<8x128xf32>
    %141 = arith.mulf %90, %140 : vector<8x128xf32>
    %c0_65 = arith.constant 0 : index
    %c2_66 = arith.constant 2 : index
    %c1_67 = arith.constant 1 : index
    %142 = vector.load %arg6[%c0_65, %c2_66, %c1_67] : memref<1x8x128xf32, #tpu.memory_space<vmem>>, vector<1x1x1xf32>
    %143 = vector.shape_cast %142 : vector<1x1x1xf32> to vector<1x1xf32>
    %144 = vector.broadcast %143 : vector<1x1xf32> to vector<8x128xf32>
    %145 = arith.mulf %80, %144 : vector<8x128xf32>
    %146 = arith.addf %141, %145 : vector<8x128xf32>
    %c0_68 = arith.constant 0 : index
    %c2_69 = arith.constant 2 : index
    %c2_70 = arith.constant 2 : index
    %147 = vector.load %arg6[%c0_68, %c2_69, %c2_70] : memref<1x8x128xf32, #tpu.memory_space<vmem>>, vector<1x1x1xf32>
    %148 = vector.shape_cast %147 : vector<1x1x1xf32> to vector<1x1xf32>
    %149 = vector.broadcast %148 : vector<1x1xf32> to vector<8x128xf32>
    %150 = arith.mulf %70, %149 : vector<8x128xf32>
    %151 = arith.addf %146, %150 : vector<8x128xf32>
    %c0_71 = arith.constant 0 : index
    %c2_72 = arith.constant 2 : index
    %c3_73 = arith.constant 3 : index
    %152 = vector.load %arg6[%c0_71, %c2_72, %c3_73] : memref<1x8x128xf32, #tpu.memory_space<vmem>>, vector<1x1x1xf32>
    %153 = vector.shape_cast %152 : vector<1x1x1xf32> to vector<1x1xf32>
    %154 = vector.broadcast %153 : vector<1x1xf32> to vector<8x128xf32>
    %155 = arith.mulf %25, %154 : vector<8x128xf32>
    %156 = arith.addf %151, %155 : vector<8x128xf32>
    %c0_74 = arith.constant 0 : index
    %c2_75 = arith.constant 2 : index
    %c4_76 = arith.constant 4 : index
    %157 = vector.load %arg6[%c0_74, %c2_75, %c4_76] : memref<1x8x128xf32, #tpu.memory_space<vmem>>, vector<1x1x1xf32>
    %158 = vector.shape_cast %157 : vector<1x1x1xf32> to vector<1x1xf32>
    %159 = vector.broadcast %158 : vector<1x1xf32> to vector<8x128xf32>
    %160 = arith.mulf %65, %159 : vector<8x128xf32>
    %161 = arith.addf %156, %160 : vector<8x128xf32>
    %c0_77 = arith.constant 0 : index
    %c2_78 = arith.constant 2 : index
    %c5_79 = arith.constant 5 : index
    %162 = vector.load %arg6[%c0_77, %c2_78, %c5_79] : memref<1x8x128xf32, #tpu.memory_space<vmem>>, vector<1x1x1xf32>
    %163 = vector.shape_cast %162 : vector<1x1x1xf32> to vector<1x1xf32>
    %164 = vector.broadcast %163 : vector<1x1xf32> to vector<8x128xf32>
    %165 = arith.mulf %75, %164 : vector<8x128xf32>
    %166 = arith.addf %161, %165 : vector<8x128xf32>
    %c0_80 = arith.constant 0 : index
    %c2_81 = arith.constant 2 : index
    %c6_82 = arith.constant 6 : index
    %167 = vector.load %arg6[%c0_80, %c2_81, %c6_82] : memref<1x8x128xf32, #tpu.memory_space<vmem>>, vector<1x1x1xf32>
    %168 = vector.shape_cast %167 : vector<1x1x1xf32> to vector<1x1xf32>
    %169 = vector.broadcast %168 : vector<1x1xf32> to vector<8x128xf32>
    %170 = arith.mulf %85, %169 : vector<8x128xf32>
    %171 = arith.addf %166, %170 : vector<8x128xf32>
    %c0_83 = arith.constant 0 : index
    %c2_84 = arith.constant 2 : index
    %c7_85 = arith.constant 7 : index
    %172 = vector.load %arg6[%c0_83, %c2_84, %c7_85] : memref<1x8x128xf32, #tpu.memory_space<vmem>>, vector<1x1x1xf32>
    %173 = vector.shape_cast %172 : vector<1x1x1xf32> to vector<1x1xf32>
    %174 = vector.broadcast %173 : vector<1x1xf32> to vector<8x128xf32>
    %175 = arith.addf %171, %174 : vector<8x128xf32>
    %176 = vector.broadcast %5 : vector<1x1xf32> to vector<8x128xf32>
    %177 = arith.mulf %175, %176 : vector<8x128xf32>
    %178 = vector.broadcast %3 : vector<1x1xf32> to vector<8x128xf32>
    %179 = arith.addf %177, %178 : vector<8x128xf32>
    %cst_86 = arith.constant 0.000000e+00 : f32
    %180 = vector.broadcast %cst_86 : f32 to vector<8x128xf32>
    %181 = arith.select %17, %179, %180 : vector<8x128xi1>, vector<8x128xf32>
    %c0_87 = arith.constant 0 : index
    %c1_88 = arith.constant 1 : index
    %c0_89 = arith.constant 0 : index
    %c0_90 = arith.constant 0 : index
    %182 = vector.load %arg7[%c0_87, %c1_88, %c0_89, %c0_90] : memref<1x4x8x128xf32, #tpu.memory_space<vmem>>, vector<1x1x8x128xf32>
    %183 = vector.shape_cast %182 : vector<1x1x8x128xf32> to vector<8x128xf32>
    %184 = vector.shape_cast %181 : vector<8x128xf32> to vector<1x1x8x128xf32>
    tpu.vector_store %arg7[%c0_87, %c1_88, %c0_89, %c0_90], %184 {strides = array<i32>} : memref<1x4x8x128xf32, #tpu.memory_space<vmem>>, vector<1x1x8x128xf32>,
    %c0_91 = arith.constant 0 : index
    %c3_92 = arith.constant 3 : index
    %c0_93 = arith.constant 0 : index
    %185 = vector.load %arg6[%c0_91, %c3_92, %c0_93] : memref<1x8x128xf32, #tpu.memory_space<vmem>>, vector<1x1x1xf32>
    %186 = vector.shape_cast %185 : vector<1x1x1xf32> to vector<1x1xf32>
    %187 = vector.broadcast %186 : vector<1x1xf32> to vector<8x128xf32>
    %188 = arith.mulf %90, %187 : vector<8x128xf32>
    %c0_94 = arith.constant 0 : index
    %c3_95 = arith.constant 3 : index
    %c1_96 = arith.constant 1 : index
    %189 = vector.load %arg6[%c0_94, %c3_95, %c1_96] : memref<1x8x128xf32, #tpu.memory_space<vmem>>, vector<1x1x1xf32>
    %190 = vector.shape_cast %189 : vector<1x1x1xf32> to vector<1x1xf32>
    %191 = vector.broadcast %190 : vector<1x1xf32> to vector<8x128xf32>
    %192 = arith.mulf %80, %191 : vector<8x128xf32>
    %193 = arith.addf %188, %192 : vector<8x128xf32>
    %c0_97 = arith.constant 0 : index
    %c3_98 = arith.constant 3 : index
    %c2_99 = arith.constant 2 : index
    %194 = vector.load %arg6[%c0_97, %c3_98, %c2_99] : memref<1x8x128xf32, #tpu.memory_space<vmem>>, vector<1x1x1xf32>
    %195 = vector.shape_cast %194 : vector<1x1x1xf32> to vector<1x1xf32>
    %196 = vector.broadcast %195 : vector<1x1xf32> to vector<8x128xf32>
    %197 = arith.mulf %70, %196 : vector<8x128xf32>
    %198 = arith.addf %193, %197 : vector<8x128xf32>
    %c0_100 = arith.constant 0 : index
    %c3_101 = arith.constant 3 : index
    %c3_102 = arith.constant 3 : index
    %199 = vector.load %arg6[%c0_100, %c3_101, %c3_102] : memref<1x8x128xf32, #tpu.memory_space<vmem>>, vector<1x1x1xf32>
    %200 = vector.shape_cast %199 : vector<1x1x1xf32> to vector<1x1xf32>
    %201 = vector.broadcast %200 : vector<1x1xf32> to vector<8x128xf32>
    %202 = arith.mulf %25, %201 : vector<8x128xf32>
    %203 = arith.addf %198, %202 : vector<8x128xf32>
    %c0_103 = arith.constant 0 : index
    %c3_104 = arith.constant 3 : index
    %c4_105 = arith.constant 4 : index
    %204 = vector.load %arg6[%c0_103, %c3_104, %c4_105] : memref<1x8x128xf32, #tpu.memory_space<vmem>>, vector<1x1x1xf32>
    %205 = vector.shape_cast %204 : vector<1x1x1xf32> to vector<1x1xf32>
    %206 = vector.broadcast %205 : vector<1x1xf32> to vector<8x128xf32>
    %207 = arith.mulf %65, %206 : vector<8x128xf32>
    %208 = arith.addf %203, %207 : vector<8x128xf32>
    %c0_106 = arith.constant 0 : index
    %c3_107 = arith.constant 3 : index
    %c5_108 = arith.constant 5 : index
    %209 = vector.load %arg6[%c0_106, %c3_107, %c5_108] : memref<1x8x128xf32, #tpu.memory_space<vmem>>, vector<1x1x1xf32>
    %210 = vector.shape_cast %209 : vector<1x1x1xf32> to vector<1x1xf32>
    %211 = vector.broadcast %210 : vector<1x1xf32> to vector<8x128xf32>
    %212 = arith.mulf %75, %211 : vector<8x128xf32>
    %213 = arith.addf %208, %212 : vector<8x128xf32>
    %c0_109 = arith.constant 0 : index
    %c3_110 = arith.constant 3 : index
    %c6_111 = arith.constant 6 : index
    %214 = vector.load %arg6[%c0_109, %c3_110, %c6_111] : memref<1x8x128xf32, #tpu.memory_space<vmem>>, vector<1x1x1xf32>
    %215 = vector.shape_cast %214 : vector<1x1x1xf32> to vector<1x1xf32>
    %216 = vector.broadcast %215 : vector<1x1xf32> to vector<8x128xf32>
    %217 = arith.mulf %85, %216 : vector<8x128xf32>
    %218 = arith.addf %213, %217 : vector<8x128xf32>
    %c0_112 = arith.constant 0 : index
    %c3_113 = arith.constant 3 : index
    %c7_114 = arith.constant 7 : index
    %219 = vector.load %arg6[%c0_112, %c3_113, %c7_114] : memref<1x8x128xf32, #tpu.memory_space<vmem>>, vector<1x1x1xf32>
    %220 = vector.shape_cast %219 : vector<1x1x1xf32> to vector<1x1xf32>
    %221 = vector.broadcast %220 : vector<1x1xf32> to vector<8x128xf32>
    %222 = arith.addf %218, %221 : vector<8x128xf32>
    %223 = vector.broadcast %5 : vector<1x1xf32> to vector<8x128xf32>
    %224 = arith.mulf %222, %223 : vector<8x128xf32>
    %225 = vector.broadcast %3 : vector<1x1xf32> to vector<8x128xf32>
    %226 = arith.addf %224, %225 : vector<8x128xf32>
    %cst_115 = arith.constant 0.000000e+00 : f32
    %227 = vector.broadcast %cst_115 : f32 to vector<8x128xf32>
    %228 = arith.select %17, %226, %227 : vector<8x128xi1>, vector<8x128xf32>
    %c0_116 = arith.constant 0 : index
    %c2_117 = arith.constant 2 : index
    %c0_118 = arith.constant 0 : index
    %c0_119 = arith.constant 0 : index
    %229 = vector.load %arg7[%c0_116, %c2_117, %c0_118, %c0_119] : memref<1x4x8x128xf32, #tpu.memory_space<vmem>>, vector<1x1x8x128xf32>
    %230 = vector.shape_cast %229 : vector<1x1x8x128xf32> to vector<8x128xf32>
    %231 = vector.shape_cast %228 : vector<8x128xf32> to vector<1x1x8x128xf32>
    tpu.vector_store %arg7[%c0_116, %c2_117, %c0_118, %c0_119], %231 {strides = array<i32>} : memref<1x4x8x128xf32, #tpu.memory_space<vmem>>, vector<1x1x8x128xf32>,
    %c0_120 = arith.constant 0 : index
    %c4_121 = arith.constant 4 : index
    %c0_122 = arith.constant 0 : index
    %232 = vector.load %arg6[%c0_120, %c4_121, %c0_122] : memref<1x8x128xf32, #tpu.memory_space<vmem>>, vector<1x1x1xf32>
    %233 = vector.shape_cast %232 : vector<1x1x1xf32> to vector<1x1xf32>
    %234 = vector.broadcast %233 : vector<1x1xf32> to vector<8x128xf32>
    %235 = arith.mulf %90, %234 : vector<8x128xf32>
    %c0_123 = arith.constant 0 : index
    %c4_124 = arith.constant 4 : index
    %c1_125 = arith.constant 1 : index
    %236 = vector.load %arg6[%c0_123, %c4_124, %c1_125] : memref<1x8x128xf32, #tpu.memory_space<vmem>>, vector<1x1x1xf32>
    %237 = vector.shape_cast %236 : vector<1x1x1xf32> to vector<1x1xf32>
    %238 = vector.broadcast %237 : vector<1x1xf32> to vector<8x128xf32>
    %239 = arith.mulf %80, %238 : vector<8x128xf32>
    %240 = arith.addf %235, %239 : vector<8x128xf32>
    %c0_126 = arith.constant 0 : index
    %c4_127 = arith.constant 4 : index
    %c2_128 = arith.constant 2 : index
    %241 = vector.load %arg6[%c0_126, %c4_127, %c2_128] : memref<1x8x128xf32, #tpu.memory_space<vmem>>, vector<1x1x1xf32>
    %242 = vector.shape_cast %241 : vector<1x1x1xf32> to vector<1x1xf32>
    %243 = vector.broadcast %242 : vector<1x1xf32> to vector<8x128xf32>
    %244 = arith.mulf %70, %243 : vector<8x128xf32>
    %245 = arith.addf %240, %244 : vector<8x128xf32>
    %c0_129 = arith.constant 0 : index
    %c4_130 = arith.constant 4 : index
    %c3_131 = arith.constant 3 : index
    %246 = vector.load %arg6[%c0_129, %c4_130, %c3_131] : memref<1x8x128xf32, #tpu.memory_space<vmem>>, vector<1x1x1xf32>
    %247 = vector.shape_cast %246 : vector<1x1x1xf32> to vector<1x1xf32>
    %248 = vector.broadcast %247 : vector<1x1xf32> to vector<8x128xf32>
    %249 = arith.mulf %25, %248 : vector<8x128xf32>
    %250 = arith.addf %245, %249 : vector<8x128xf32>
    %c0_132 = arith.constant 0 : index
    %c4_133 = arith.constant 4 : index
    %c4_134 = arith.constant 4 : index
    %251 = vector.load %arg6[%c0_132, %c4_133, %c4_134] : memref<1x8x128xf32, #tpu.memory_space<vmem>>, vector<1x1x1xf32>
    %252 = vector.shape_cast %251 : vector<1x1x1xf32> to vector<1x1xf32>
    %253 = vector.broadcast %252 : vector<1x1xf32> to vector<8x128xf32>
    %254 = arith.mulf %65, %253 : vector<8x128xf32>
    %255 = arith.addf %250, %254 : vector<8x128xf32>
    %c0_135 = arith.constant 0 : index
    %c4_136 = arith.constant 4 : index
    %c5_137 = arith.constant 5 : index
    %256 = vector.load %arg6[%c0_135, %c4_136, %c5_137] : memref<1x8x128xf32, #tpu.memory_space<vmem>>, vector<1x1x1xf32>
    %257 = vector.shape_cast %256 : vector<1x1x1xf32> to vector<1x1xf32>
    %258 = vector.broadcast %257 : vector<1x1xf32> to vector<8x128xf32>
    %259 = arith.mulf %75, %258 : vector<8x128xf32>
    %260 = arith.addf %255, %259 : vector<8x128xf32>
    %c0_138 = arith.constant 0 : index
    %c4_139 = arith.constant 4 : index
    %c6_140 = arith.constant 6 : index
    %261 = vector.load %arg6[%c0_138, %c4_139, %c6_140] : memref<1x8x128xf32, #tpu.memory_space<vmem>>, vector<1x1x1xf32>
    %262 = vector.shape_cast %261 : vector<1x1x1xf32> to vector<1x1xf32>
    %263 = vector.broadcast %262 : vector<1x1xf32> to vector<8x128xf32>
    %264 = arith.mulf %85, %263 : vector<8x128xf32>
    %265 = arith.addf %260, %264 : vector<8x128xf32>
    %c0_141 = arith.constant 0 : index
    %c4_142 = arith.constant 4 : index
    %c7_143 = arith.constant 7 : index
    %266 = vector.load %arg6[%c0_141, %c4_142, %c7_143] : memref<1x8x128xf32, #tpu.memory_space<vmem>>, vector<1x1x1xf32>
    %267 = vector.shape_cast %266 : vector<1x1x1xf32> to vector<1x1xf32>
    %268 = vector.broadcast %267 : vector<1x1xf32> to vector<8x128xf32>
    %269 = arith.addf %265, %268 : vector<8x128xf32>
    %270 = vector.broadcast %5 : vector<1x1xf32> to vector<8x128xf32>
    %271 = arith.mulf %269, %270 : vector<8x128xf32>
    %272 = vector.broadcast %3 : vector<1x1xf32> to vector<8x128xf32>
    %273 = arith.addf %271, %272 : vector<8x128xf32>
    %cst_144 = arith.constant 0.000000e+00 : f32
    %274 = vector.broadcast %cst_144 : f32 to vector<8x128xf32>
    %275 = arith.select %17, %273, %274 : vector<8x128xi1>, vector<8x128xf32>
    %c0_145 = arith.constant 0 : index
    %c3_146 = arith.constant 3 : index
    %c0_147 = arith.constant 0 : index
    %c0_148 = arith.constant 0 : index
    %276 = vector.load %arg7[%c0_145, %c3_146, %c0_147, %c0_148] : memref<1x4x8x128xf32, #tpu.memory_space<vmem>>, vector<1x1x8x128xf32>
    %277 = vector.shape_cast %276 : vector<1x1x8x128xf32> to vector<8x128xf32>
    %278 = vector.shape_cast %275 : vector<8x128xf32> to vector<1x1x8x128xf32>
    tpu.vector_store %arg7[%c0_145, %c3_146, %c0_147, %c0_148], %278 {strides = array<i32>} : memref<1x4x8x128xf32, #tpu.memory_space<vmem>>, vector<1x1x8x128xf32>,
    return
  }
  func.func @transform_0(%arg0: i32, %arg1: i32, %arg2: memref<2xi32, #tpu.memory_space<smem>>) -> (i32, i32, i32) {
    %c0_i32 = arith.constant 0 : i32
    %c0_i32_0 = arith.constant 0 : i32
    return %arg0, %arg1, %c0_i32 : i32, i32, i32
  }
  func.func @transform_1(%arg0: i32, %arg1: i32, %arg2: memref<2xi32, #tpu.memory_space<smem>>) -> (i32, i32, i32) {
    %c1_i32 = arith.constant 1 : i32
    %0 = arith.muli %arg1, %c1_i32 : i32
    %c1_i32_0 = arith.constant 1 : i32
    %1 = arith.subi %0, %c1_i32_0 : i32
    %c0_i32 = arith.constant 0 : i32
    %2 = arith.maxsi %1, %c0_i32 : i32
    %c0_i32_1 = arith.constant 0 : i32
    %c0_i32_2 = arith.constant 0 : i32
    return %arg0, %2, %c0_i32_1 : i32, i32, i32
  }
  func.func @transform_2(%arg0: i32, %arg1: i32, %arg2: memref<2xi32, #tpu.memory_space<smem>>) -> (i32, i32, i32) {
    %c1_i32 = arith.constant 1 : i32
    %0 = arith.addi %arg1, %c1_i32 : i32
    %c1_i32_0 = arith.constant 1 : i32
    %1 = arith.muli %0, %c1_i32_0 : i32
    %c0_i32 = arith.constant 0 : i32
    %2 = arith.minsi %1, %c0_i32 : i32
    %c0_i32_1 = arith.constant 0 : i32
    %c0_i32_2 = arith.constant 0 : i32
    return %arg0, %2, %c0_i32_1 : i32, i32, i32
  }
  func.func @transform_3(%arg0: i32, %arg1: i32, %arg2: memref<2xi32, #tpu.memory_space<smem>>) -> (i32, i32, i32) {
    %c0_i32 = arith.constant 0 : i32
    %c0_i32_0 = arith.constant 0 : i32
    %c0_i32_1 = arith.constant 0 : i32
    return %arg0, %c0_i32, %c0_i32_0 : i32, i32, i32
  }
  func.func @transform_4(%arg0: i32, %arg1: i32, %arg2: memref<2xi32, #tpu.memory_space<smem>>) -> (i32, i32, i32, i32) {
    %c0_i32 = arith.constant 0 : i32
    %c0_i32_0 = arith.constant 0 : i32
    %c0_i32_1 = arith.constant 0 : i32
    return %arg0, %c0_i32, %arg1, %c0_i32_0 : i32, i32, i32, i32
  }
}

</mosaic_0001>

<llo_original>
// kernel: tpu_custom_call.1
$region0: #{tpu_custom_call.1}
  #allocation0 [shape = 'u32[]', space=smem, size = 0x4, offset = 0x4, fixed_abs, tag = 'smem constant byte address 0x4 - core index']
  #allocation1 [shape = 'u32[144,128]{1,0:T(1,128)}', space=vmem, size = 0x12000, scoped, tag = 'internal scratch']
  #allocation2 [shape = 'f32[24,128]{1,0:T(8,128)}', space=vmem, size = 0x3000, scoped, tag = 'scratch operand']
  #allocation3 [shape = 's32[1]{0}', space=sflag, size = 0x4, scoped, tag = 'scoped memory for tpu_custom_call.1']
  #allocation4 [shape = 'u8[512]{0}', space=smem, size = 0x200, scoped, tag = 'prefetched SMEM operand 0']
  %s0 = inlined_call_operand.hbm [shape: s32[2], index: 0, kind: input, shape index: {}]
  %s1 = inlined_call_operand.hbm [shape: f32[2,8,128], index: 1, kind: input, shape index: {}]
  %s2 = inlined_call_operand.hbm [shape: f32[2,8,128], index: 2, kind: input, shape index: {}]
  %s3 = inlined_call_operand.hbm [shape: f32[2,8,128], index: 3, kind: input, shape index: {}]
  %s4 = inlined_call_operand.hbm [shape: f32[2,8,128], index: 4, kind: input, shape index: {}]
  %s5 = inlined_call_operand.hbm [shape: f32[2,4,8,128], index: 5, kind: output, shape index: {}]
  %s6 = sld [smem:[#allocation0]]
  $region65: #{tpu_custom_call.1} parent=0
    _
  %s8 = ssub.s32 1, %s6
  %s9 = scalar_select 0, %s8, %s6
  %11 = dma.hbm_to_smem %s0, 16, [#allocation4], [#allocation3]
  %12 = dma.done [#allocation3], 16
  %13 = sfence
  $region1: #{tpu_custom_call.1} parent=0
    #allocation5 [shape = 'u8[8192]{0}', space=vmem, size = 0x2000, scoped, tag = 'input window, operand 1']
    #allocation6 [shape = 's32[2]{0}', space=sflag, size = 0x8, scoped, tag = 'scoped memory for tpu_custom_call.1']
    #allocation7 [shape = 's32[2]{0}', space=sflag, size = 0x8, scoped, tag = 'scoped memory for tpu_custom_call.1']
    #allocation8 [shape = 'u8[8192]{0}', space=vmem, size = 0x2000, scoped, tag = 'input window, operand 2']
    #allocation9 [shape = 's32[2]{0}', space=sflag, size = 0x8, scoped, tag = 'scoped memory for tpu_custom_call.1']
    #allocation10 [shape = 'u8[8192]{0}', space=vmem, size = 0x2000, scoped, tag = 'input window, operand 3']
    #allocation11 [shape = 'u8[8192]{0}', space=vmem, size = 0x2000, scoped, tag = 'input window, operand 4']
    #allocation12 [shape = 's32[2]{0}', space=sflag, size = 0x8, scoped, tag = 'scoped memory for tpu_custom_call.1']
    #allocation13 [shape = 'u8[32768]{0}', space=vmem, size = 0x8000, scoped, tag = 'output window, operand 0']
    %14 = vsyncpa [#allocation6], 0
    %s15 = scalar_lea.sflag [#allocation6], 1
    %16 = vsyncpa %s15, 0
    %17 = vsyncpa [#allocation9], 0
    %s18 = scalar_lea.sflag [#allocation9], 1
    %19 = vsyncpa %s18, 0
    %20 = vsyncpa [#allocation12], 0
    %s21 = scalar_lea.sflag [#allocation12], 1
    %22 = vsyncpa %s21, 0
    %23 = vsyncpa [#allocation7], 0
    %s24 = scalar_lea.sflag [#allocation7], 1
    %25 = vsyncpa %s24, 0
    loop: start=0, step=1, limit=4
    $region2: #{tpu_custom_call.1} parent=1 // loop_pre_header
      _
    $region3: #{tpu_custom_call.1} parent=1 // loop_header
      %s27 = sphi 0, %s31
      %p28 = scmp.ge.s32.totalorder %s27, 4
      %s34 = sphi 0, %s46
      %s35 = sphi 0, %s42
      %s36 = sphi 0, %s34
      %s37 = sphi 0, %s35
      %s38 = sphi 0, %s36
      %s39 = sphi 0, %s37
      %s51 = sphi 0, %s53
      %s54 = sphi 0, %s51
      %s55 = sphi 0, %s54
      %s71 = sphi 0, %s55
      %s85 = sphi 0, %s87
      %s88 = sphi 0, %s85
      %s89 = sphi 0, %s88
      %s105 = sphi 0, %s89
      %s119 = sphi 0, %s121
      %s122 = sphi 0, %s119
      %s123 = sphi 0, %s122
      %s139 = sphi 0, %s123
      %s145 = sphi 0, %s147
      %s148 = sphi 0, %s145
      %s149 = sphi 0, %s148
      %s165 = sphi 0, %s149
      %s173 = sphi 0, %s175
      %s176 = sphi 0, %s173
      %s177 = sphi 0, %s176
      %s193 = sphi 0, %s177
    $region4: #{tpu_custom_call.1} parent=1 // loop_header_branch
      %30 = sbr.rel (%p28) target = $region8
    $region5: #{tpu_custom_call.1} parent=1 // loop_body
      %s32 = ssub.s32 %s27, 1
      %s33 = ssub.s32 %s27, 2
      %s40 = sadd.s32 1, %s35
      %p41 = scmp.ge.s32.totalorder %s40, 1
      %s42 = scalar_select %p41, 0, %s40
      %s43 = sadd.s32 1, %s34
      %s44 = scalar_select %p41, %s43, %s34
      %p45 = scmp.ge.s32.totalorder %s44, 2
      %s46 = scalar_select %p45, 0, %s44
      %s47 = ssub.s32 %s34, %s46
      %s48 = ssub.s32 %s35, %s42
      %s49 = sor.u32 %s47, %s48
      %p50 = scmp.eq.s32.totalorder %s49, 0
      %s52 = sadd.s32 %s51, 1
      %s53 = scalar_select %p50, %s51, %s52
      %p56 = pneg %p50
      %p57 = scmp.eq.s32.totalorder %s27, 1
      %p58 = por %p56, %p57
      %p59 = scmp.ne.s32.totalorder %s51, %s54
      %p60 = scmp.eq.s32.totalorder %s27, 0
      %p61 = por %p59, %p60
      %p62 = scmp.ne.s32.totalorder %s51, %s54
      %p63 = scmp.eq.s32.totalorder %s32, 1
      %p64 = por %p62, %p63
      %p65 = scmp.ne.s32.totalorder %s54, %s55
      %p66 = scmp.eq.s32.totalorder %s32, 0
      %p67 = por %p65, %p66
      %p68 = scmp.ne.s32.totalorder %s54, %s55
      %p69 = scmp.eq.s32.totalorder %s33, 1
      %p70 = por %p68, %p69
      %p72 = scmp.ne.s32.totalorder %s55, %s71
      %p73 = scmp.eq.s32.totalorder %s33, 0
      %p74 = por %p72, %p73
      %s75 = ssub.s32 %s35, 1
      %p76 = scmp.gt.s32.totalorder %s75, 0
      %s77 = scalar_select %p76, %s75, 0
      %s78 = ssub.s32 %s42, 1
      %p79 = scmp.gt.s32.totalorder %s78, 0
      %s80 = scalar_select %p79, %s78, 0
      %s81 = ssub.s32 %s34, %s46
      %s82 = ssub.s32 %s77, %s80
      %s83 = sor.u32 %s81, %s82
      %p84 = scmp.eq.s32.totalorder %s83, 0
      %s86 = sadd.s32 %s85, 1
      %s87 = scalar_select %p84, %s85, %s86
      %p90 = pneg %p84
      %p91 = scmp.eq.s32.totalorder %s27, 1
      %p92 = por %p90, %p91
      %p93 = scmp.ne.s32.totalorder %s85, %s88
      %p94 = scmp.eq.s32.totalorder %s27, 0
      %p95 = por %p93, %p94
      %p96 = scmp.ne.s32.totalorder %s85, %s88
      %p97 = scmp.eq.s32.totalorder %s32, 1
      %p98 = por %p96, %p97
      %p99 = scmp.ne.s32.totalorder %s88, %s89
      %p100 = scmp.eq.s32.totalorder %s32, 0
      %p101 = por %p99, %p100
      %p102 = scmp.ne.s32.totalorder %s88, %s89
      %p103 = scmp.eq.s32.totalorder %s33, 1
      %p104 = por %p102, %p103
      %p106 = scmp.ne.s32.totalorder %s89, %s105
      %p107 = scmp.eq.s32.totalorder %s33, 0
      %p108 = por %p106, %p107
      %s109 = sadd.s32 %s35, 1
      %p110 = scmp.lt.s32.totalorder %s109, 0
      %s111 = scalar_select %p110, %s109, 0
      %s112 = sadd.s32 %s42, 1
      %p113 = scmp.lt.s32.totalorder %s112, 0
      %s114 = scalar_select %p113, %s112, 0
      %s115 = ssub.s32 %s34, %s46
      %s116 = ssub.s32 %s111, %s114
      %s117 = sor.u32 %s115, %s116
      %p118 = scmp.eq.s32.totalorder %s117, 0
      %s120 = sadd.s32 %s119, 1
      %s121 = scalar_select %p118, %s119, %s120
      %p124 = pneg %p118
      %p125 = scmp.eq.s32.totalorder %s27, 1
      %p126 = por %p124, %p125
      %p127 = scmp.ne.s32.totalorder %s119, %s122
      %p128 = scmp.eq.s32.totalorder %s27, 0
      %p129 = por %p127, %p128
      %p130 = scmp.ne.s32.totalorder %s119, %s122
      %p131 = scmp.eq.s32.totalorder %s32, 1
      %p132 = por %p130, %p131
      %p133 = scmp.ne.s32.totalorder %s122, %s123
      %p134 = scmp.eq.s32.totalorder %s32, 0
      %p135 = por %p133, %p134
      %p136 = scmp.ne.s32.totalorder %s122, %s123
      %p137 = scmp.eq.s32.totalorder %s33, 1
      %p138 = por %p136, %p137
      %p140 = scmp.ne.s32.totalorder %s123, %s139
      %p141 = scmp.eq.s32.totalorder %s33, 0
      %p142 = por %p140, %p141
      %s143 = ssub.s32 %s34, %s46
      %p144 = scmp.eq.s32.totalorder %s143, 0
      %s146 = sadd.s32 %s145, 1
      %s147 = scalar_select %p144, %s145, %s146
      %p150 = pneg %p144
      %p151 = scmp.eq.s32.totalorder %s27, 1
      %p152 = por %p150, %p151
      %p153 = scmp.ne.s32.totalorder %s145, %s148
      %p154 = scmp.eq.s32.totalorder %s27, 0
      %p155 = por %p153, %p154
      %p156 = scmp.ne.s32.totalorder %s145, %s148
      %p157 = scmp.eq.s32.totalorder %s32, 1
      %p158 = por %p156, %p157
      %p159 = scmp.ne.s32.totalorder %s148, %s149
      %p160 = scmp.eq.s32.totalorder %s32, 0
      %p161 = por %p159, %p160
      %p162 = scmp.ne.s32.totalorder %s148, %s149
      %p163 = scmp.eq.s32.totalorder %s33, 1
      %p164 = por %p162, %p163
      %p166 = scmp.ne.s32.totalorder %s149, %s165
      %p167 = scmp.eq.s32.totalorder %s33, 0
      %p168 = por %p166, %p167
      %s169 = ssub.s32 %s34, %s46
      %s170 = ssub.s32 %s35, %s42
      %s171 = sor.u32 %s169, %s170
      %p172 = scmp.eq.s32.totalorder %s171, 0
      %s174 = sadd.s32 %s173, 1
      %s175 = scalar_select %p172, %s173, %s174
      %p178 = pneg %p172
      %p179 = scmp.eq.s32.totalorder %s27, 1
      %p180 = por %p178, %p179
      %p181 = scmp.ne.s32.totalorder %s173, %s176
      %p182 = scmp.eq.s32.totalorder %s27, 0
      %p183 = por %p181, %p182
      %p184 = scmp.ne.s32.totalorder %s173, %s176
      %p185 = scmp.eq.s32.totalorder %s32, 1
      %p186 = por %p184, %p185
      %p187 = scmp.ne.s32.totalorder %s176, %s177
      %p188 = scmp.eq.s32.totalorder %s32, 0
      %p189 = por %p187, %p188
      %p190 = scmp.ne.s32.totalorder %s176, %s177
      %p191 = scmp.eq.s32.totalorder %s33, 1
      %p192 = por %p190, %p191
      %p194 = scmp.ne.s32.totalorder %s177, %s193
      %p195 = scmp.eq.s32.totalorder %s33, 0
      %p196 = por %p194, %p195
      %p197 = scmp.le.s32.totalorder 1, %s27
      %p198 = scmp.lt.s32.totalorder %s27, 3
      %p199 = pnand %p197, %p198
      %p200 = pneg %p199
      // Predicated region
      $region9: #{tpu_custom_call.1} parent=5 // pred_check
        _
      $region10: #{tpu_custom_call.1} parent=5 // pred_check_branch
        %202 = sbr.rel (%p199) target = $region12
      $region11: #{tpu_custom_call.1} parent=5 // pred_region
        %s203 = ssub.s32 %s27, 1
      $region12: #{tpu_custom_call.1} parent=5 // pred_fallthru
        _
      %p204 = scmp.lt.s32.totalorder %s27, 2
      // Predicated region
      $region13: #{tpu_custom_call.1} parent=5 // pred_check
        %p205 = pneg %p204
      $region14: #{tpu_custom_call.1} parent=5 // pred_check_branch
        %207 = sbr.rel (%p205) target = $region16
      $region15: #{tpu_custom_call.1} parent=5 // pred_region
        // Predicated region
        $region17: #{tpu_custom_call.1} parent=15 // pred_check
          %p208 = pneg %p61
        $region18: #{tpu_custom_call.1} parent=15 // pred_check_branch
          %210 = sbr.rel (%p208) target = $region20
        $region19: #{tpu_custom_call.1} parent=15 // pred_region
          %s211 = sand.u32 %s51, 1
          %s212 = scalar_lea.sflag [#allocation6], %s211
          %s213 = sand.u32 %s51, 1
          %s214 = smul.addr %s213, 8
          %s215 = scalar_lea.vmem [#allocation5], %s214
          %s217 = ssub.s32 128, 128
          %218 = vsyncadd %s212, %s217
          %s219 = sadd.s32 %s35, %s34
          %s220 = smul.addr %s219, 128
          %s221 = scalar_lea.hbm %s1, %s220
          %s223 = sshll.u32 %s215, 4
          %s224 = int_to_ptr.vmem [resolvable:$true] %s223
          %226 = dma.hbm_to_vmem [thread:$0]  %s221, 128, %s224, %s212
        $region20: #{tpu_custom_call.1} parent=15 // pred_fallthru
          _
        // Predicated region
        $region21: #{tpu_custom_call.1} parent=15 // pred_check
          %p227 = pneg %p95
        $region22: #{tpu_custom_call.1} parent=15 // pred_check_branch
          %229 = sbr.rel (%p227) target = $region24
        $region23: #{tpu_custom_call.1} parent=15 // pred_region
          %s230 = sand.u32 %s27, 1
          %s231 = scalar_lea.sflag [#allocation9], %s230
          %s232 = sand.u32 %s85, 1
          %s233 = smul.addr %s232, 8
          %s234 = scalar_lea.vmem [#allocation8], %s233
          %s235 = ssub.s32 %s35, 1
          %p236 = scmp.gt.s32.totalorder %s235, 0
          %s237 = scalar_select %p236, %s235, 0
          %s239 = ssub.s32 128, 128
          %240 = vsyncadd %s231, %s239
          %s241 = sadd.s32 %s237, %s34
          %s242 = smul.addr %s241, 128
          %s243 = scalar_lea.hbm %s2, %s242
          %s245 = sshll.u32 %s234, 4
          %s246 = int_to_ptr.vmem [resolvable:$true] %s245
          %248 = dma.hbm_to_vmem [thread:$0]  %s243, 128, %s246, %s231
        $region24: #{tpu_custom_call.1} parent=15 // pred_fallthru
          _
        // Predicated region
        $region25: #{tpu_custom_call.1} parent=15 // pred_check
          %p249 = pneg %p129
        $region26: #{tpu_custom_call.1} parent=15 // pred_check_branch
          %251 = sbr.rel (%p249) target = $region28
        $region27: #{tpu_custom_call.1} parent=15 // pred_region
          %s252 = sand.u32 %s27, 1
          %s253 = scalar_lea.sflag [#allocation9], %s252
          %s254 = sand.u32 %s119, 1
          %s255 = smul.addr %s254, 8
          %s256 = scalar_lea.vmem [#allocation10], %s255
          %s257 = sadd.s32 %s35, 1
          %p258 = scmp.lt.s32.totalorder %s257, 0
          %s259 = scalar_select %p258, %s257, 0
          %s261 = ssub.s32 128, 128
          %262 = vsyncadd %s253, %s261
          %s263 = sadd.s32 %s259, %s34
          %s264 = smul.addr %s263, 128
          %s265 = scalar_lea.hbm %s3, %s264
          %s267 = sshll.u32 %s256, 4
          %s268 = int_to_ptr.vmem [resolvable:$true] %s267
          %270 = dma.hbm_to_vmem [thread:$0]  %s265, 128, %s268, %s253
        $region28: #{tpu_custom_call.1} parent=15 // pred_fallthru
          _
        // Predicated region
        $region29: #{tpu_custom_call.1} parent=15 // pred_check
          %p271 = pneg %p155
        $region30: #{tpu_custom_call.1} parent=15 // pred_check_branch
          %273 = sbr.rel (%p271) target = $region32
        $region31: #{tpu_custom_call.1} parent=15 // pred_region
          %s274 = sand.u32 %s145, 1
          %s275 = scalar_lea.sflag [#allocation12], %s274
          %s276 = sand.u32 %s145, 1
          %s277 = smul.addr %s276, 8
          %s278 = scalar_lea.vmem [#allocation11], %s277
          %s280 = ssub.s32 128, 128
          %281 = vsyncadd %s275, %s280
          %s282 = smul.addr %s34, 128
          %s283 = scalar_lea.hbm %s4, %s282
          %s285 = sshll.u32 %s278, 4
          %s286 = int_to_ptr.vmem [resolvable:$true] %s285
          %288 = dma.hbm_to_vmem [thread:$0]  %s283, 128, %s286, %s275
        $region32: #{tpu_custom_call.1} parent=15 // pred_fallthru
          _
      $region16: #{tpu_custom_call.1} parent=5 // pred_fallthru
        _
      %p289 = scmp.le.s32.totalorder 1, %s27
      %p290 = scmp.lt.s32.totalorder %s27, 3
      %p291 = pnand %p289, %p290
      %p292 = pneg %p291
      // Predicated region
      $region33: #{tpu_custom_call.1} parent=5 // pred_check
        _
      $region34: #{tpu_custom_call.1} parent=5 // pred_check_branch
        %294 = sbr.rel (%p291) target = $region36
      $region35: #{tpu_custom_call.1} parent=5 // pred_region
        %s295 = ssub.s32 %s27, 1
        %s296 = sand.u32 %s54, 1
        %s297 = scalar_lea.sflag [#allocation6], %s296
        %s298 = sand.u32 %s54, 1
        %s299 = smul.addr %s298, 8
        %s300 = scalar_lea.vmem [#allocation5], %s299
        // Predicated region
        $region37: #{tpu_custom_call.1} parent=35 // pred_check
          %p301 = pneg %p67
        $region38: #{tpu_custom_call.1} parent=35 // pred_check_branch
          %303 = sbr.rel (%p301) target = $region40
        $region39: #{tpu_custom_call.1} parent=35 // pred_region
          %304 = dma.done %s297, 128
        $region40: #{tpu_custom_call.1} parent=35 // pred_fallthru
          _
        %s305 = sand.u32 %s32, 1
        %s306 = scalar_lea.sflag [#allocation9], %s305
        %s307 = sand.u32 %s88, 1
        %s308 = smul.addr %s307, 8
        %s309 = scalar_lea.vmem [#allocation8], %s308
        // Predicated region
        $region41: #{tpu_custom_call.1} parent=35 // pred_check
          %p310 = pneg %p101
        $region42: #{tpu_custom_call.1} parent=35 // pred_check_branch
          %312 = sbr.rel (%p310) target = $region44
        $region43: #{tpu_custom_call.1} parent=35 // pred_region
          %313 = dma.done %s306, 128
        $region44: #{tpu_custom_call.1} parent=35 // pred_fallthru
          _
        %s314 = sand.u32 %s32, 1
        %s315 = scalar_lea.sflag [#allocation9], %s314
        %s316 = sand.u32 %s122, 1
        %s317 = smul.addr %s316, 8
        %s318 = scalar_lea.vmem [#allocation10], %s317
        // Predicated region
        $region45: #{tpu_custom_call.1} parent=35 // pred_check
          %p319 = pneg %p135
        $region46: #{tpu_custom_call.1} parent=35 // pred_check_branch
          %321 = sbr.rel (%p319) target = $region48
        $region47: #{tpu_custom_call.1} parent=35 // pred_region
          %322 = dma.done %s315, 128
        $region48: #{tpu_custom_call.1} parent=35 // pred_fallthru
          _
        %s323 = sand.u32 %s148, 1
        %s324 = scalar_lea.sflag [#allocation12], %s323
        %s325 = sand.u32 %s148, 1
        %s326 = smul.addr %s325, 8
        %s327 = scalar_lea.vmem [#allocation11], %s326
        // Predicated region
        $region49: #{tpu_custom_call.1} parent=35 // pred_check
          %p328 = pneg %p161
        $region50: #{tpu_custom_call.1} parent=35 // pred_check_branch
          %330 = sbr.rel (%p328) target = $region52
        $region51: #{tpu_custom_call.1} parent=35 // pred_region
          %331 = dma.done %s324, 128
        $region52: #{tpu_custom_call.1} parent=35 // pred_fallthru
          _
        %s332 = sand.u32 %s54, 1
        %s333 = scalar_lea.sflag [#allocation6], %s332
        %s334 = sand.u32 %s54, 1
        %s335 = smul.addr %s334, 8
        %s336 = scalar_lea.vmem [#allocation5], %s335
        %p337 = pneg %p67
        %p338 = pneg %p64
        %s339 = sand.u32 %s32, 1
        %s340 = scalar_lea.sflag [#allocation9], %s339
        %s341 = sand.u32 %s88, 1
        %s342 = smul.addr %s341, 8
        %s343 = scalar_lea.vmem [#allocation8], %s342
        %p344 = pneg %p101
        %p345 = pneg %p98
        %s346 = sand.u32 %s32, 1
        %s347 = scalar_lea.sflag [#allocation9], %s346
        %s348 = sand.u32 %s122, 1
        %s349 = smul.addr %s348, 8
        %s350 = scalar_lea.vmem [#allocation10], %s349
        %p351 = pneg %p135
        %p352 = pneg %p132
        %s353 = sand.u32 %s148, 1
        %s354 = scalar_lea.sflag [#allocation12], %s353
        %s355 = sand.u32 %s148, 1
        %s356 = smul.addr %s355, 8
        %s357 = scalar_lea.vmem [#allocation11], %s356
        %p358 = pneg %p161
        %p359 = pneg %p158
        %p360 = pneg %p189
        %p361 = pneg %p186
        %s362 = sand.u32 %s176, 1
        %s363 = scalar_lea.sflag [#allocation7], %s362
        %s364 = sand.u32 %s176, 1
        %s365 = smul.addr %s364, 32
        %s366 = scalar_lea.vmem [#allocation13], %s365
        %s367 = ssub.s32 %s37, 1
        %p368 = scmp.gt.s32.totalorder %s367, 0
        %s369 = scalar_select %p368, %s367, 0
        %s370 = sadd.s32 %s37, 1
        %p371 = scmp.lt.s32.totalorder %s370, 0
        %s372 = scalar_select %p371, %s370, 0
        %s373 = sld [smem:[#allocation4 + %s36]]
        %v374 = vld [vmem:[%s327] sm:$0x1]
        %s375 = smul.u32 %s37, 1024
        %v376 = vlaneseq
        %v377 = vshrl.u32 %v376, 7
        %v378 = vlaneseq
        %v379 = vand.u32 %v378, 127
        %v380 = vmul.u32 %v377, 128
        %v381 = vstv %s375
        %v382 = vadd.s32 %v381, %v380
        %v383 = vadd.s32 %v382, %v379
        %v384 = vstv %s373
        %vm385 = vcmp.lt.s32.totalorder %v383, %v384
        %v386 = vld [vmem:[%s300] sm:$0xff]
        %s388 = vtos %v374
        %v389 = vstv %s388
        %v391 = vsub.f32 %v386, %v389
        %392 = vrot.lane.b32.xlu0 %v374, 126
        %v393 = vpop.permute.xlu0 %392
        %s394 = vtos %v393
        %v395 = vstv %s394
        %v397 = vmul.f32 %v391, %v395
        %v398 = vsel %vm385, %v397, 0.0
        %s399 = ssub.s32 %s375, 128
        %v400 = vstv %s399
        %v401 = vadd.s32 %v400, %v379
        %vm402 = vcmp.ge.s32.totalorder %v401, 0
        %vm403 = vcmp.lt.s32.totalorder %v401, %v384
        %vm404 = vmand %vm402, %vm403
        %v405 = vld [vmem:[%s309 + $0x7] sm:$0x1]
        %406 = vset.pattern.permute.xlu0 0
        %407 = vperm.xlu0 %406, %v374
        %v408 = vpop.permute.xlu0 %407
        %v410 = vsub.f32 %v405, %v408
        %411 = vset.pattern.permute.xlu0 2
        %412 = vperm.xlu0 %411, %v374
        %v413 = vpop.permute.xlu0 %412
        %v415 = vmul.f32 %v410, %v413
        %v416 = vsel %vm404, %v415, 0.0
        %s417 = sadd.s32 %s375, 1024
        %v418 = vstv %s417
        %v419 = vadd.s32 %v418, %v379
        %vm420 = vcmp.lt.s32.totalorder %v419, %v384
        %v421 = vld [vmem:[%s318] sm:$0x1]
        %v422 = vsub.f32 %v421, %v408
        %v423 = vmul.f32 %v422, %v413
        %v424 = vsel %vm420, %v423, 0.0
        %425 = vst [vmem:[#allocation2 + $0x8] sm:$0xff] %v398
        %426 = vst [vmem:[#allocation2 + $0x7] sm:$0x1] %v416
        %427 = vst [vmem:[#allocation2 + $0x10] sm:$0x1] %v424
        %v428 = vld [vmem:[#allocation2 + $0x7] sm:$0xff]
        %v429 = vld [vmem:[#allocation2 + $0x9] sm:$0xff]
        %430 = vrot.lane.b32.xlu0 %v398, 127
        %v431 = vpop.permute.xlu0 %430
        %432 = vrot.lane.b32.xlu0 %v429, 127
        %v433 = vpop.permute.xlu0 %432
        %vm434 = vcmp.lt.s32.totalorder %v379, 127
        %v435 = vsel %vm434, %v431, %v433
        %436 = vrot.lane.b32.xlu0 %v398, 1
        %v437 = vpop.permute.xlu0 %436
        %438 = vrot.lane.b32.xlu0 %v428, 1
        %v439 = vpop.permute.xlu0 %438
        %vm440 = vcmp.ge.s32.totalorder %v379, 1
        %v441 = vsel %vm440, %v437, %v439
        %442 = vrot.lane.b32.xlu0 %v398, 126
        %v443 = vpop.permute.xlu0 %442
        %444 = vrot.lane.b32.xlu0 %v429, 126
        %v445 = vpop.permute.xlu0 %444
        %vm446 = vcmp.lt.s32.totalorder %v379, 126
        %v447 = vsel %vm446, %v443, %v445
        %448 = vrot.lane.b32.xlu0 %v398, 2
        %v449 = vpop.permute.xlu0 %448
        %450 = vrot.lane.b32.xlu0 %v428, 2
        %v451 = vpop.permute.xlu0 %450
        %vm452 = vcmp.ge.s32.totalorder %v379, 2
        %v453 = vsel %vm452, %v449, %v451
        %454 = vrot.lane.b32.xlu0 %v398, 125
        %v455 = vpop.permute.xlu0 %454
        %456 = vrot.lane.b32.xlu0 %v429, 125
        %v457 = vpop.permute.xlu0 %456
        %vm458 = vcmp.lt.s32.totalorder %v379, 125
        %v459 = vsel %vm458, %v455, %v457
        %460 = vrot.lane.b32.xlu0 %v398, 3
        %v461 = vpop.permute.xlu0 %460
        %462 = vrot.lane.b32.xlu0 %v428, 3
        %v463 = vpop.permute.xlu0 %462
        %vm464 = vcmp.ge.s32.totalorder %v379, 3
        %v465 = vsel %vm464, %v461, %v463
        %v466 = vld [vmem:[%s327 + $0x1] sm:$0x1]
        %s468 = vtos %v466
        %v469 = vstv %s468
        %v471 = vmul.f32 %v465, %v469
        %472 = vrot.lane.b32.xlu0 %v466, 127
        %v473 = vpop.permute.xlu0 %472
        %s474 = vtos %v473
        %v475 = vstv %s474
        %v477 = vmul.f32 %v453, %v475
        %v478 = vadd.f32 %v471, %v477
        %479 = vrot.lane.b32.xlu0 %v466, 126
        %v480 = vpop.permute.xlu0 %479
        %s481 = vtos %v480
        %v482 = vstv %s481
        %v484 = vmul.f32 %v441, %v482
        %v485 = vadd.f32 %v478, %v484
        %486 = vrot.lane.b32.xlu0 %v466, 125
        %v487 = vpop.permute.xlu0 %486
        %s488 = vtos %v487
        %v489 = vstv %s488
        %v491 = vmul.f32 %v398, %v489
        %v492 = vadd.f32 %v485, %v491
        %493 = vrot.lane.b32.xlu0 %v466, 124
        %v494 = vpop.permute.xlu0 %493
        %s495 = vtos %v494
        %v496 = vstv %s495
        %v498 = vmul.f32 %v435, %v496
        %v499 = vadd.f32 %v492, %v498
        %500 = vrot.lane.b32.xlu0 %v466, 123
        %v501 = vpop.permute.xlu0 %500
        %s502 = vtos %v501
        %v503 = vstv %s502
        %v505 = vmul.f32 %v447, %v503
        %v506 = vadd.f32 %v499, %v505
        %507 = vrot.lane.b32.xlu0 %v466, 122
        %v508 = vpop.permute.xlu0 %507
        %s509 = vtos %v508
        %v510 = vstv %s509
        %v512 = vmul.f32 %v459, %v510
        %v513 = vadd.f32 %v506, %v512
        %514 = vrot.lane.b32.xlu0 %v466, 121
        %v515 = vpop.permute.xlu0 %514
        %s516 = vtos %v515
        %v517 = vstv %s516
        %v519 = vadd.f32 %v513, %v517
        %520 = vrot.lane.b32.xlu0 %v374, 127
        %v521 = vpop.permute.xlu0 %520
        %s522 = vtos %v521
        %v523 = vstv %s522
        %v525 = vmul.f32 %v519, %v523
        %v526 = vadd.f32 %v525, %v389
        %v527 = vsel %vm385, %v526, 0.0
        %528 = vst [vmem:[%s366] sm:$0xff] %v527
        %v529 = vld [vmem:[%s327 + $0x2] sm:$0x1]
        %s531 = vtos %v529
        %v532 = vstv %s531
        %v534 = vmul.f32 %v465, %v532
        %535 = vrot.lane.b32.xlu0 %v529, 127
        %v536 = vpop.permute.xlu0 %535
        %s537 = vtos %v536
        %v538 = vstv %s537
        %v540 = vmul.f32 %v453, %v538
        %v541 = vadd.f32 %v534, %v540
        %542 = vrot.lane.b32.xlu0 %v529, 126
        %v543 = vpop.permute.xlu0 %542
        %s544 = vtos %v543
        %v545 = vstv %s544
        %v547 = vmul.f32 %v441, %v545
        %v548 = vadd.f32 %v541, %v547
        %549 = vrot.lane.b32.xlu0 %v529, 125
        %v550 = vpop.permute.xlu0 %549
        %s551 = vtos %v550
        %v552 = vstv %s551
        %v554 = vmul.f32 %v398, %v552
        %v555 = vadd.f32 %v548, %v554
        %556 = vrot.lane.b32.xlu0 %v529, 124
        %v557 = vpop.permute.xlu0 %556
        %s558 = vtos %v557
        %v559 = vstv %s558
        %v561 = vmul.f32 %v435, %v559
        %v562 = vadd.f32 %v555, %v561
        %563 = vrot.lane.b32.xlu0 %v529, 123
        %v564 = vpop.permute.xlu0 %563
        %s565 = vtos %v564
        %v566 = vstv %s565
        %v568 = vmul.f32 %v447, %v566
        %v569 = vadd.f32 %v562, %v568
        %570 = vrot.lane.b32.xlu0 %v529, 122
        %v571 = vpop.permute.xlu0 %570
        %s572 = vtos %v571
        %v573 = vstv %s572
        %v575 = vmul.f32 %v459, %v573
        %v576 = vadd.f32 %v569, %v575
        %577 = vrot.lane.b32.xlu0 %v529, 121
        %v578 = vpop.permute.xlu0 %577
        %s579 = vtos %v578
        %v580 = vstv %s579
        %v582 = vadd.f32 %v576, %v580
        %v583 = vmul.f32 %v582, %v523
        %v584 = vadd.f32 %v583, %v389
        %v585 = vsel %vm385, %v584, 0.0
        %s586 = scalar_lea.vmem %s366, 8 [#allocation13]
        %587 = vst [vmem:[%s586] sm:$0xff] %v585
        %v588 = vld [vmem:[%s327 + $0x3] sm:$0x1]
        %s590 = vtos %v588
        %v591 = vstv %s590
        %v593 = vmul.f32 %v465, %v591
        %594 = vrot.lane.b32.xlu0 %v588, 127
        %v595 = vpop.permute.xlu0 %594
        %s596 = vtos %v595
        %v597 = vstv %s596
        %v599 = vmul.f32 %v453, %v597
        %v600 = vadd.f32 %v593, %v599
        %601 = vrot.lane.b32.xlu0 %v588, 126
        %v602 = vpop.permute.xlu0 %601
        %s603 = vtos %v602
        %v604 = vstv %s603
        %v606 = vmul.f32 %v441, %v604
        %v607 = vadd.f32 %v600, %v606
        %608 = vrot.lane.b32.xlu0 %v588, 125
        %v609 = vpop.permute.xlu0 %608
        %s610 = vtos %v609
        %v611 = vstv %s610
        %v613 = vmul.f32 %v398, %v611
        %v614 = vadd.f32 %v607, %v613
        %615 = vrot.lane.b32.xlu0 %v588, 124
        %v616 = vpop.permute.xlu0 %615
        %s617 = vtos %v616
        %v618 = vstv %s617
        %v620 = vmul.f32 %v435, %v618
        %v621 = vadd.f32 %v614, %v620
        %622 = vrot.lane.b32.xlu0 %v588, 123
        %v623 = vpop.permute.xlu0 %622
        %s624 = vtos %v623
        %v625 = vstv %s624
        %v627 = vmul.f32 %v447, %v625
        %v628 = vadd.f32 %v621, %v627
        %629 = vrot.lane.b32.xlu0 %v588, 122
        %v630 = vpop.permute.xlu0 %629
        %s631 = vtos %v630
        %v632 = vstv %s631
        %v634 = vmul.f32 %v459, %v632
        %v635 = vadd.f32 %v628, %v634
        %636 = vrot.lane.b32.xlu0 %v588, 121
        %v637 = vpop.permute.xlu0 %636
        %s638 = vtos %v637
        %v639 = vstv %s638
        %v641 = vadd.f32 %v635, %v639
        %v642 = vmul.f32 %v641, %v523
        %v643 = vadd.f32 %v642, %v389
        %v644 = vsel %vm385, %v643, 0.0
        %s645 = scalar_lea.vmem %s366, 16 [#allocation13]
        %646 = vst [vmem:[%s645] sm:$0xff] %v644
        %v647 = vld [vmem:[%s327 + $0x4] sm:$0x1]
        %s649 = vtos %v647
        %v650 = vstv %s649
        %v652 = vmul.f32 %v465, %v650
        %653 = vrot.lane.b32.xlu0 %v647, 127
        %v654 = vpop.permute.xlu0 %653
        %s655 = vtos %v654
        %v656 = vstv %s655
        %v658 = vmul.f32 %v453, %v656
        %v659 = vadd.f32 %v652, %v658
        %660 = vrot.lane.b32.xlu0 %v647, 126
        %v661 = vpop.permute.xlu0 %660
        %s662 = vtos %v661
        %v663 = vstv %s662
        %v665 = vmul.f32 %v441, %v663
        %v666 = vadd.f32 %v659, %v665
        %667 = vrot.lane.b32.xlu0 %v647, 125
        %v668 = vpop.permute.xlu0 %667
        %s669 = vtos %v668
        %v670 = vstv %s669
        %v672 = vmul.f32 %v398, %v670
        %v673 = vadd.f32 %v666, %v672
        %674 = vrot.lane.b32.xlu0 %v647, 124
        %v675 = vpop.permute.xlu0 %674
        %s676 = vtos %v675
        %v677 = vstv %s676
        %v679 = vmul.f32 %v435, %v677
        %v680 = vadd.f32 %v673, %v679
        %681 = vrot.lane.b32.xlu0 %v647, 123
        %v682 = vpop.permute.xlu0 %681
        %s683 = vtos %v682
        %v684 = vstv %s683
        %v686 = vmul.f32 %v447, %v684
        %v687 = vadd.f32 %v680, %v686
        %688 = vrot.lane.b32.xlu0 %v647, 122
        %v689 = vpop.permute.xlu0 %688
        %s690 = vtos %v689
        %v691 = vstv %s690
        %v693 = vmul.f32 %v459, %v691
        %v694 = vadd.f32 %v687, %v693
        %695 = vrot.lane.b32.xlu0 %v647, 121
        %v696 = vpop.permute.xlu0 %695
        %s697 = vtos %v696
        %v698 = vstv %s697
        %v700 = vadd.f32 %v694, %v698
        %v701 = vmul.f32 %v700, %v523
        %v702 = vadd.f32 %v701, %v389
        %v703 = vsel %vm385, %v702, 0.0
        %s704 = scalar_lea.vmem %s366, 24 [#allocation13]
        %705 = vst [vmem:[%s704] sm:$0xff] %v703
        %s706 = sand.u32 %s176, 1
        %s707 = scalar_lea.sflag [#allocation7], %s706
        %s708 = sand.u32 %s176, 1
        %s709 = smul.addr %s708, 32
        %s710 = scalar_lea.vmem [#allocation13], %s709
        // Predicated region
        $region53: #{tpu_custom_call.1} parent=35 // pred_check
          %p711 = pneg %p186
        $region54: #{tpu_custom_call.1} parent=35 // pred_check_branch
          %713 = sbr.rel (%p711) target = $region56
        $region55: #{tpu_custom_call.1} parent=35 // pred_region
          %s715 = ssub.s32 512, 512
          %716 = vsyncadd %s707, %s715
          %s717 = smul.addr %s36, 4
          %s718 = sadd.s32 %s37, %s717
          %s719 = smul.addr %s718, 128
          %s720 = scalar_lea.hbm %s5, %s719
          %s721 = sshll.u32 %s710, 4
          %s722 = int_to_ptr.vmem [resolvable:$true] %s721
          %727 = dma.vmem_to_hbm [thread:$0]  %s722, 512, %s720, %s707, 128, 128, 8
        $region56: #{tpu_custom_call.1} parent=35 // pred_fallthru
          _
      $region36: #{tpu_custom_call.1} parent=5 // pred_fallthru
        _
      %p728 = scmp.le.s32.totalorder 2, %s27
      // Predicated region
      $region57: #{tpu_custom_call.1} parent=5 // pred_check
        %p729 = pneg %p728
      $region58: #{tpu_custom_call.1} parent=5 // pred_check_branch
        %731 = sbr.rel (%p729) target = $region60
      $region59: #{tpu_custom_call.1} parent=5 // pred_region
        %s732 = ssub.s32 %s27, 2
        // Predicated region
        $region61: #{tpu_custom_call.1} parent=59 // pred_check
          %p733 = pneg %p192
        $region62: #{tpu_custom_call.1} parent=59 // pred_check_branch
          %735 = sbr.rel (%p733) target = $region64
        $region63: #{tpu_custom_call.1} parent=59 // pred_region
          %s736 = sand.u32 %s177, 1
          %s737 = scalar_lea.sflag [#allocation7], %s736
          %s738 = sand.u32 %s177, 1
          %s739 = smul.addr %s738, 32
          %s740 = scalar_lea.vmem [#allocation13], %s739
          %741 = dma.done %s737, 512
        $region64: #{tpu_custom_call.1} parent=59 // pred_fallthru
          _
      $region60: #{tpu_custom_call.1} parent=5 // pred_fallthru
        _
    $region6: #{tpu_custom_call.1} parent=1 // loop_footer
      %s31 = sadd.s32 1, %s27
    $region7: #{tpu_custom_call.1} parent=1 // loop_footer_branch
      %26 = sbr.rel target = $region3
    $region8: #{tpu_custom_call.1} parent=1 // loop_exit
      _
    %742 = vsyncpa [#allocation6], 1
    %s743 = scalar_lea.sflag [#allocation6], 1
    %744 = vsyncpa %s743, 1
    %745 = vsyncpa [#allocation9], 1
    %s746 = scalar_lea.sflag [#allocation9], 1
    %747 = vsyncpa %s746, 1
    %748 = vsyncpa [#allocation12], 1
    %s749 = scalar_lea.sflag [#allocation12], 1
    %750 = vsyncpa %s749, 1
    %751 = vsyncpa [#allocation7], 1
    %s752 = scalar_lea.sflag [#allocation7], 1
    %753 = vsyncpa %s752, 1

</llo_original>
